<compile_context>
chip_gen: v7x
topology: tpu7x:2x2x1
jax: 0.10.0
libtpu: 0.0.40
codegen_flags: <defaults>
</compile_context>

<pallas_src>
import math
import functools

import numpy as np
import jax
import jax.numpy as jnp
from jax.experimental import pallas as pl
from jax.experimental.pallas import tpu as pltpu

_MIB = 1024 * 1024


# --------------------------------------------------------------------------- #
# Stage 1: masked cumulative sums (+ normalize / offset), once per batch.
# --------------------------------------------------------------------------- #
def _embed_kernel(mask_ref, lh_ref, uw_ref, emb_ref, *, normalize, scale, eps, offset):
    # mask_ref: (1, H, W)    int32  padding mask (1 = padded)
    # lh_ref:   (H, H)       bf16   lower-triangular ones (cumsum over H)
    # uw_ref:   (W, W)       bf16   upper-triangular ones (cumsum over W)
    # emb_ref:  (1, 2, H, W) f32    out: [y_embed, x_embed]
    m = mask_ref[0]
    H, W = m.shape
    nm = (1 - m).astype(jnp.bfloat16)            # not_mask, 0/1 exact in bf16

    # Cumsums as triangular-ones matmuls on the MXU (f32 accumulate, exact):
    #   y_embed[i, j] = sum_{k<=i} not_mask[k, j]
    #   x_embed[i, j] = sum_{k<=j} not_mask[i, k]
    ye = jnp.dot(lh_ref[...], nm, preferred_element_type=jnp.float32)   # (H, W)
    xe = jnp.dot(nm, uw_ref[...], preferred_element_type=jnp.float32)   # (H, W)

    if normalize:
        # Denominator uses the *pre-offset* embed (matches the PyTorch RHS);
        # the divide is folded into one reciprocal per row / column.
        inv_y = scale / (ye[H - 1:H, :] + eps)   # (1, W)
        inv_x = scale / (xe[:, W - 1:W] + eps)   # (H, 1)
        if offset != 0.0:
            ye = ye + offset
            xe = xe + offset
        ye = ye * inv_y
        xe = xe * inv_x
    elif offset != 0.0:
        ye = ye + offset
        xe = xe + offset

    emb_ref[0, 0] = ye
    emb_ref[0, 1] = xe


# --------------------------------------------------------------------------- #
# Stage 2: lane-dense per-channel sin(embed * coef + off)   (cos == sin(x+pi/2))
# --------------------------------------------------------------------------- #
def _sincos_kernel(emb_ref, coef_ref, off_ref, out_ref, *, n_y):
    # emb_ref:  (1, 2, HW)  f32  row 0 = flattened y_embed, row 1 = flattened x_embed
    # coef_ref: (CB, 1)     f32  reciprocal dim_t for this channel tile
    # off_ref:  (CB, 1)     f32  0 for sin channels, pi/2 for cos channels
    # out_ref:  (1, CB, HW)      lane-dense NC(HW) output tile
    is_y = pl.program_id(1) < n_y
    e = jnp.where(is_y, emb_ref[0, 0:1, :], emb_ref[0, 1:2, :])   # (1, HW)
    phase = e * coef_ref[...] + off_ref[...]                      # (CB, HW)
    out_ref[0] = jnp.sin(phase).astype(out_ref.dtype)


# --------------------------------------------------------------------------- #
# Sizing helpers (byte-based, device-aware).
# --------------------------------------------------------------------------- #
def _vmem_info():
    """Returns (per-core VMEM bytes, has-2-TensorCores) for the current backend."""
    try:
        kind = jax.devices()[0].device_kind.lower()
    except Exception:
        kind = ""
    if "v7" in kind or "7x" in kind:
        return 64 * _MIB, True
    two_tc = ("v4" in kind) or ("v5p" in kind)   # megacore parts
    return 128 * _MIB, two_tc


def _pick_channel_block(F, B, HW, vmem_cap, two_tc):
    # Channel tiles must stay inside one of the pos_y / pos_x halves and satisfy
    # the sublane-dim block constraint -> divisors of F that are multiples of 8.
    divs = [d for d in range(F, 7, -1) if F % d == 0 and d % 8 == 0]
    assert divs, "num_pos_feats must be a multiple of 8"

    def footprint(cb):
        # out block x2 buffers + ~3x out-block of intermediates + embed block + slack
        return 5 * cb * HW * 4 + 32 * HW + (1 << 20)

    budget = int(vmem_cap * 0.55)
    cb = next((d for d in divs if footprint(d) <= budget), divs[-1])

    # On 2-TensorCore parts make sure there are enough grid steps (>=3 per core)
    # to pipeline the output writeback even when B == 1.
    if two_tc and B * (2 * F // cb) < 6:
        smaller = [d for d in divs if d < cb and B * (2 * F // d) >= 6]
        cb = smaller[0] if smaller else divs[-1]
    return cb, footprint(cb)


# --------------------------------------------------------------------------- #
# Public wrapper.
# --------------------------------------------------------------------------- #
def position_embedding_sine(mask, *, num_pos_feats=64, temperature=10000,
                            normalize=False, scale=2 * math.pi, eps=1e-6,
                            offset=0.0, out_dtype=jnp.float32):
    """mask: (B, H, W) bool/int (1 = padded).  Returns (B, 2*num_pos_feats, H, W)."""
    B, H, W = mask.shape
    F = int(num_pos_feats)
    HW = H * W

    if isinstance(temperature, (int, float)):
        t_x = t_y = float(temperature)
    else:
        assert len(temperature) == 2, "temperature must be a number or (t_x, t_y)"
        t_x, t_y = float(temperature[0]), float(temperature[1])

    # Host constants: per-output-channel reciprocal frequency and phase offset.
    #   channel c     (< F): sin/cos of y_embed / t_y ** (2*(c//2)/F)
    #   channel F + c      : sin/cos of x_embed / t_x ** (2*(c//2)/F)
    # cos channels get a +pi/2 phase so no channel interleave is needed in-kernel.
    exp = 2.0 * (np.arange(F) // 2).astype(np.float64) / float(F)
    coef_np = np.concatenate([np.power(t_y, -exp), np.power(t_x, -exp)])
    off_np = np.tile(np.array([0.0, math.pi / 2.0]), F)
    chan_coef = jnp.asarray(coef_np, jnp.float32).reshape(2 * F, 1)
    chan_off = jnp.asarray(off_np, jnp.float32).reshape(2 * F, 1)

    # Triangular ones matrices for the MXU cumsums (0/1 values -> exact in bf16).
    lh = jnp.asarray(np.tril(np.ones((H, H), np.float32)), jnp.bfloat16)
    uw = jnp.asarray(np.triu(np.ones((W, W), np.float32)), jnp.bfloat16)

    mask_i = mask.astype(jnp.int32)

    # ---- Stage 1: y/x cumulative embeds, once per batch element -------------
    embed = pl.pallas_call(
        functools.partial(_embed_kernel, normalize=bool(normalize),
                          scale=float(scale), eps=float(eps), offset=float(offset)),
        out_shape=jax.ShapeDtypeStruct((B, 2, H, W), jnp.float32),
        grid=(B,),
        in_specs=[
            pl.BlockSpec((1, H, W), lambda b: (b, 0, 0)),
            pl.BlockSpec((H, H), lambda b: (0, 0)),      # DMA'd once (constant idx)
            pl.BlockSpec((W, W), lambda b: (0, 0)),      # DMA'd once (constant idx)
        ],
        out_specs=pl.BlockSpec((1, 2, H, W), lambda b: (b, 0, 0, 0)),
        compiler_params=pltpu.CompilerParams(dimension_semantics=("parallel",)),
    )(mask_i, lh, uw)

    # Tiny relayout (2*HW floats per batch): put H*W on the lane axis for stage 2.
    embed_flat = embed.reshape(B, 2, HW)

    # ---- Stage 2: lane-dense per-channel sin / cos ---------------------------
    vmem_cap, two_tc = _vmem_info()
    CB, need = _pick_channel_block(F, B, HW, vmem_cap, two_tc)
    n_y = F // CB                 # channel tiles in the pos_y half
    n_ct = 2 * n_y                # total channel tiles (y half then x half)
    vmem_limit = int(min(vmem_cap - 16 * _MIB, max(32 * _MIB, 2 * need)))

    out_flat = pl.pallas_call(
        functools.partial(_sincos_kernel, n_y=n_y),
        out_shape=jax.ShapeDtypeStruct((B, 2 * F, HW), out_dtype),
        grid=(B, n_ct),
        in_specs=[
            pl.BlockSpec((1, 2, HW), lambda b, c: (b, 0, 0)),
            pl.BlockSpec((CB, 1), lambda b, c: (c, 0)),
            pl.BlockSpec((CB, 1), lambda b, c: (c, 0)),
        ],
        out_specs=pl.BlockSpec((1, CB, HW), lambda b, c: (b, c, 0)),
        compiler_params=pltpu.CompilerParams(
            dimension_semantics=("parallel", "parallel"),
            vmem_limit_bytes=vmem_limit),
    )(embed_flat, chan_coef, chan_off)

    # Contiguous NCHW result: reshaping (B, 2F, H*W) -> (B, 2F, H, W) is a cheap
    # metadata-level reshape (and fuses into the consumer under jit).
    return out_flat.reshape(B, 2 * F, H, W)


# --------------------------------------------------------------------------- #
# Pure numpy reference of the PyTorch forward (for checking).
# --------------------------------------------------------------------------- #
def _reference_numpy(mask, *, num_pos_feats, temperature, normalize, scale, eps, offset):
    mask = np.asarray(mask).astype(np.int32)
    F = num_pos_feats
    dim_exp = 2.0 * (np.arange(F) // 2) / float(F)
    if isinstance(temperature, (int, float)):
        dim_tx = dim_ty = np.power(float(temperature), dim_exp)
    else:
        dim_tx = np.power(float(temperature[0]), dim_exp)
        dim_ty = np.power(float(temperature[1]), dim_exp)
    not_mask = 1 - mask
    y_embed = np.cumsum(not_mask, axis=1, dtype=np.float32)
    x_embed = np.cumsum(not_mask, axis=2, dtype=np.float32)
    if normalize:
        y_embed = (y_embed + offset) / (y_embed[:, -1:, :] + eps) * scale
        x_embed = (x_embed + offset) / (x_embed[:, :, -1:] + eps) * scale
    else:
        y_embed = y_embed + offset
        x_embed = x_embed + offset
    pos_x = x_embed[:, :, :, None] / dim_tx
    pos_y = y_embed[:, :, :, None] / dim_ty
    px = np.stack((np.sin(pos_x[:, :, :, 0::2]), np.cos(pos_x[:, :, :, 1::2])),
                  axis=4).reshape(*pos_x.shape[:3], -1)
    py = np.stack((np.sin(pos_y[:, :, :, 0::2]), np.cos(pos_y[:, :, :, 1::2])),
                  axis=4).reshape(*pos_y.shape[:3], -1)
    pos = np.concatenate((py, px), axis=3).transpose(0, 3, 1, 2)
    return pos.astype(np.float32)


if __name__ == "__main__":
    B, H, W = 2, 16, 16
    F = 16                                     # output channels = 2*F = 32

    key = jax.random.PRNGKey(0)
    mask = jax.random.bernoulli(key, 0.3, (B, H, W))    # 1 = padded (as in DETR)

    configs = [
        dict(num_pos_feats=F, temperature=10000, normalize=False,
             scale=2 * math.pi, eps=1e-6, offset=0.0),
        dict(num_pos_feats=F, temperature=(20, 10000), normalize=True,
             scale=2 * math.pi, eps=1e-6, offset=-0.5),
    ]

    for cfg in configs:
        fn = jax.jit(functools.partial(position_embedding_sine, **cfg))
        out = jax.block_until_ready(fn(mask))
        ref = _reference_numpy(np.asarray(mask), **cfg)
        assert out.shape == (B, 2 * F, H, W), out.shape
        np.testing.assert_allclose(np.asarray(out), ref, rtol=1e-3, atol=2e-4)

    print("KERNEL_OK")
</pallas_src>

<mosaic_0001>
module attributes {stable_mosaic.version = 11 : i64} {
  func.func @_embed_kernel(%arg0: i32, %arg1: memref<1x16x16xi32, #tpu.memory_space<vmem>>, %arg2: memref<16x16xbf16, #tpu.memory_space<vmem>>, %arg3: memref<16x16xbf16, #tpu.memory_space<vmem>>, %arg4: memref<1x2x16x16xf32, #tpu.memory_space<vmem>>) attributes {dimension_semantics = [#tpu.dimension_semantics<parallel>], iteration_bounds = array<i64: 2>, scalar_prefetch = 0 : i64, scratch_operands = 0 : i64, tpu.core_type = #tpu.core_type<tc>, window_params = [{transform_indices = @transform_0, window_bounds = array<i64: 1, 16, 16>}, {pipeline_mode = #tpu.pipeline_mode<synchronous>, transform_indices = @transform_1, window_bounds = array<i64: 16, 16>}, {pipeline_mode = #tpu.pipeline_mode<synchronous>, transform_indices = @transform_2, window_bounds = array<i64: 16, 16>}, {transform_indices = @transform_3, window_bounds = array<i64: 1, 2, 16, 16>}]} {
    %c0 = arith.constant 0 : index
    %c0_0 = arith.constant 0 : index
    %c0_1 = arith.constant 0 : index
    %0 = vector.load %arg1[%c0, %c0_0, %c0_1] : memref<1x16x16xi32, #tpu.memory_space<vmem>>, vector<1x16x16xi32>
    %1 = vector.shape_cast %0 : vector<1x16x16xi32> to vector<16x16xi32>
    %c1_i32 = arith.constant 1 : i32
    %2 = vector.broadcast %c1_i32 : i32 to vector<16x16xi32>
    %3 = arith.subi %2, %1 : vector<16x16xi32>
    %4 = arith.sitofp %3 : vector<16x16xi32> to vector<16x16xbf16>
    %c0_2 = arith.constant 0 : index
    %c0_3 = arith.constant 0 : index
    %5 = vector.load %arg2[%c0_2, %c0_3] : memref<16x16xbf16, #tpu.memory_space<vmem>>, vector<16x16xbf16>
    %cst = arith.constant dense<0.000000e+00> : vector<16x16xf32>
    %6 = tpu.matmul %5, %4, %cst {dimension_numbers = #tpu.dot_dimension_numbers<[1], [0], [0], [1], [0, 0, 1, 1], [], []>} : vector<16x16xbf16>, vector<16x16xbf16>, vector<16x16xf32> -> vector<16x16xf32>
    %c0_4 = arith.constant 0 : index
    %c0_5 = arith.constant 0 : index
    %7 = vector.load %arg3[%c0_4, %c0_5] : memref<16x16xbf16, #tpu.memory_space<vmem>>, vector<16x16xbf16>
    %cst_6 = arith.constant dense<0.000000e+00> : vector<16x16xf32>
    %8 = tpu.matmul %4, %7, %cst_6 {dimension_numbers = #tpu.dot_dimension_numbers<[1], [0], [0], [1], [0, 0, 1, 1], [], []>} : vector<16x16xbf16>, vector<16x16xbf16>, vector<16x16xf32> -> vector<16x16xf32>
    %c0_7 = arith.constant 0 : index
    %c0_8 = arith.constant 0 : index
    %c0_9 = arith.constant 0 : index
    %c0_10 = arith.constant 0 : index
    %9 = vector.load %arg4[%c0_7, %c0_8, %c0_9, %c0_10] : memref<1x2x16x16xf32, #tpu.memory_space<vmem>>, vector<1x1x16x16xf32>
    %10 = vector.shape_cast %9 : vector<1x1x16x16xf32> to vector<16x16xf32>
    %11 = vector.shape_cast %6 : vector<16x16xf32> to vector<1x1x16x16xf32>
    tpu.vector_store %arg4[%c0_7, %c0_8, %c0_9, %c0_10], %11 {strides = array<i32>} : memref<1x2x16x16xf32, #tpu.memory_space<vmem>>, vector<1x1x16x16xf32>,
    %c0_11 = arith.constant 0 : index
    %c1 = arith.constant 1 : index
    %c0_12 = arith.constant 0 : index
    %c0_13 = arith.constant 0 : index
    %12 = vector.load %arg4[%c0_11, %c1, %c0_12, %c0_13] : memref<1x2x16x16xf32, #tpu.memory_space<vmem>>, vector<1x1x16x16xf32>
    %13 = vector.shape_cast %12 : vector<1x1x16x16xf32> to vector<16x16xf32>
    %14 = vector.shape_cast %8 : vector<16x16xf32> to vector<1x1x16x16xf32>
    tpu.vector_store %arg4[%c0_11, %c1, %c0_12, %c0_13], %14 {strides = array<i32>} : memref<1x2x16x16xf32, #tpu.memory_space<vmem>>, vector<1x1x16x16xf32>,
    return
  }
  func.func @transform_0(%arg0: i32) -> (i32, i32, i32) {
    %c0_i32 = arith.constant 0 : i32
    %c0_i32_0 = arith.constant 0 : i32
    %c0_i32_1 = arith.constant 0 : i32
    return %arg0, %c0_i32, %c0_i32_0 : i32, i32, i32
  }
  func.func @transform_1(%arg0: i32) -> (i32, i32) {
    %c0_i32 = arith.constant 0 : i32
    %c0_i32_0 = arith.constant 0 : i32
    %c0_i32_1 = arith.constant 0 : i32
    return %c0_i32, %c0_i32_0 : i32, i32
  }
  func.func @transform_2(%arg0: i32) -> (i32, i32) {
    %c0_i32 = arith.constant 0 : i32
    %c0_i32_0 = arith.constant 0 : i32
    %c0_i32_1 = arith.constant 0 : i32
    return %c0_i32, %c0_i32_0 : i32, i32
  }
  func.func @transform_3(%arg0: i32) -> (i32, i32, i32, i32) {
    %c0_i32 = arith.constant 0 : i32
    %c0_i32_0 = arith.constant 0 : i32
    %c0_i32_1 = arith.constant 0 : i32
    %c0_i32_2 = arith.constant 0 : i32
    return %arg0, %c0_i32, %c0_i32_0, %c0_i32_1 : i32, i32, i32, i32
  }
}

module attributes {stable_mosaic.version = 11 : i64} {
  func.func @_sincos_kernel(%arg0: i32, %arg1: i32, %arg2: memref<1x2x256xf32, #tpu.memory_space<vmem>>, %arg3: memref<16x1xf32, #tpu.memory_space<vmem>>, %arg4: memref<16x1xf32, #tpu.memory_space<vmem>>, %arg5: memref<1x16x256xf32, #tpu.memory_space<vmem>>) attributes {dimension_semantics = [#tpu.dimension_semantics<parallel>, #tpu.dimension_semantics<parallel>], iteration_bounds = array<i64: 2, 2>, scalar_prefetch = 0 : i64, scratch_operands = 0 : i64, tpu.core_type = #tpu.core_type<tc>, window_params = [{transform_indices = @transform_0, window_bounds = array<i64: 1, 2, 256>}, {transform_indices = @transform_1, window_bounds = array<i64: 16, 1>}, {transform_indices = @transform_2, window_bounds = array<i64: 16, 1>}, {transform_indices = @transform_3, window_bounds = array<i64: 1, 16, 256>}]} {
    %c1_i32 = arith.constant 1 : i32
    %0 = arith.cmpi slt, %arg1, %c1_i32 : i32
    %c0 = arith.constant 0 : index
    %c0_0 = arith.constant 0 : index
    %c0_1 = arith.constant 0 : index
    %1 = vector.load %arg2[%c0, %c0_0, %c0_1] : memref<1x2x256xf32, #tpu.memory_space<vmem>>, vector<1x1x256xf32>
    %2 = vector.shape_cast %1 : vector<1x1x256xf32> to vector<1x256xf32>
    %c0_2 = arith.constant 0 : index
    %c1 = arith.constant 1 : index
    %c0_3 = arith.constant 0 : index
    %3 = vector.load %arg2[%c0_2, %c1, %c0_3] : memref<1x2x256xf32, #tpu.memory_space<vmem>>, vector<1x1x256xf32>
    %4 = vector.shape_cast %3 : vector<1x1x256xf32> to vector<1x256xf32>
    %5 = arith.select %0, %2, %4 : vector<1x256xf32>
    %c0_4 = arith.constant 0 : index
    %c0_5 = arith.constant 0 : index
    %6 = vector.load %arg3[%c0_4, %c0_5] : memref<16x1xf32, #tpu.memory_space<vmem>>, vector<16x1xf32>
    %7 = vector.broadcast %5 : vector<1x256xf32> to vector<16x256xf32>
    %8 = vector.broadcast %6 : vector<16x1xf32> to vector<16x256xf32>
    %9 = arith.mulf %7, %8 : vector<16x256xf32>
    %c0_6 = arith.constant 0 : index
    %c0_7 = arith.constant 0 : index
    %10 = vector.load %arg4[%c0_6, %c0_7] : memref<16x1xf32, #tpu.memory_space<vmem>>, vector<16x1xf32>
    %11 = vector.broadcast %10 : vector<16x1xf32> to vector<16x256xf32>
    %12 = arith.addf %9, %11 : vector<16x256xf32>
    %13 = math.sin %12 : vector<16x256xf32>
    %c0_8 = arith.constant 0 : index
    %c0_9 = arith.constant 0 : index
    %c0_10 = arith.constant 0 : index
    %14 = vector.load %arg5[%c0_8, %c0_9, %c0_10] : memref<1x16x256xf32, #tpu.memory_space<vmem>>, vector<1x16x256xf32>
    %15 = vector.shape_cast %14 : vector<1x16x256xf32> to vector<16x256xf32>
    %16 = vector.shape_cast %13 : vector<16x256xf32> to vector<1x16x256xf32>
    tpu.vector_store %arg5[%c0_8, %c0_9, %c0_10], %16 {strides = array<i32>} : memref<1x16x256xf32, #tpu.memory_space<vmem>>, vector<1x16x256xf32>,
    return
  }
  func.func @transform_0(%arg0: i32, %arg1: i32) -> (i32, i32, i32) {
    %c0_i32 = arith.constant 0 : i32
    %c0_i32_0 = arith.constant 0 : i32
    %c0_i32_1 = arith.constant 0 : i32
    return %arg0, %c0_i32, %c0_i32_0 : i32, i32, i32
  }
  func.func @transform_1(%arg0: i32, %arg1: i32) -> (i32, i32) {
    %c0_i32 = arith.constant 0 : i32
    %c0_i32_0 = arith.constant 0 : i32
    return %arg1, %c0_i32 : i32, i32
  }
  func.func @transform_2(%arg0: i32, %arg1: i32) -> (i32, i32) {
    %c0_i32 = arith.constant 0 : i32
    %c0_i32_0 = arith.constant 0 : i32
    return %arg1, %c0_i32 : i32, i32
  }
  func.func @transform_3(%arg0: i32, %arg1: i32) -> (i32, i32, i32) {
    %c0_i32 = arith.constant 0 : i32
    %c0_i32_0 = arith.constant 0 : i32
    return %arg0, %arg1, %c0_i32 : i32, i32, i32
  }
}

</mosaic_0001>

<llo_original>
// kernel: position_embedding_sine.2
$region0: #{position_embedding_sine.2}
  #allocation0 [shape = 'u32[]', space=smem, size = 0x4, offset = 0x4, fixed_abs, tag = 'smem constant byte address 0x4 - core index']
  #allocation1 [shape = 'u32[144,128]{1,0:T(1,128)}', space=vmem, size = 0x12000, scoped, tag = 'internal scratch']
  %s0 = inlined_call_operand.vmem [shape: s32[2,16,16], index: 0, kind: input, shape index: {}]
  %s1 = inlined_call_operand.vmem [shape: bf16[16,16], index: 1, kind: input, shape index: {}]
  %s2 = inlined_call_operand.vmem [shape: bf16[16,16], index: 2, kind: input, shape index: {}]
  %s3 = inlined_call_operand.vmem [shape: f32[2,2,16,16], index: 3, kind: output, shape index: {}]
  %s4 = sld [smem:[#allocation0]]
  $region45: #{position_embedding_sine.2} parent=0
    _
  %s6 = ssub.s32 1, %s4
  %s7 = scalar_select 0, %s6, %s4
  loop: start=0, step=1, limit=4
  $region2: #{position_embedding_sine.2} parent=0 // loop_pre_header
    _
  $region3: #{position_embedding_sine.2} parent=0 // loop_header
    %s9 = sphi 0, %s13
    %p10 = scmp.ge.s32.totalorder %s9, 4
    %s19 = sphi 0, %s21
    %s22 = sphi 0, %s19
    %s23 = sphi 0, %s22
    %s39 = sphi 0, %s23
    %s43 = sphi 0, %s43
    %s45 = sphi 0, %s43
    %s46 = sphi 0, %s45
    %s60 = sphi 0, %s46
    %s64 = sphi 0, %s64
    %s66 = sphi 0, %s64
    %s67 = sphi 0, %s66
    %s81 = sphi 0, %s67
    %s87 = sphi 0, %s89
    %s90 = sphi 0, %s87
    %s91 = sphi 0, %s90
    %s107 = sphi 0, %s91
  $region4: #{position_embedding_sine.2} parent=0 // loop_header_branch
    %12 = sbr.rel (%p10) target = $region8
  $region5: #{position_embedding_sine.2} parent=0 // loop_body
    %s14 = ssub.s32 %s9, 1
    %s15 = ssub.s32 %s9, 2
    %s16 = sadd.s32 %s9, 1
    %s17 = ssub.s32 %s9, %s16
    %p18 = scmp.eq.s32.totalorder %s17, 0
    %s20 = sadd.s32 %s19, 1
    %s21 = scalar_select %p18, %s19, %s20
    %p24 = pneg %p18
    %p25 = scmp.eq.s32.totalorder %s9, 1
    %p26 = por %p24, %p25
    %p27 = scmp.ne.s32.totalorder %s19, %s22
    %p28 = scmp.eq.s32.totalorder %s9, 0
    %p29 = por %p27, %p28
    %p30 = scmp.ne.s32.totalorder %s19, %s22
    %p31 = scmp.eq.s32.totalorder %s14, 1
    %p32 = por %p30, %p31
    %p33 = scmp.ne.s32.totalorder %s22, %s23
    %p34 = scmp.eq.s32.totalorder %s14, 0
    %p35 = por %p33, %p34
    %p36 = scmp.ne.s32.totalorder %s22, %s23
    %p37 = scmp.eq.s32.totalorder %s15, 1
    %p38 = por %p36, %p37
    %p40 = scmp.ne.s32.totalorder %s23, %s39
    %p41 = scmp.eq.s32.totalorder %s15, 0
    %p42 = por %p40, %p41
    %s44 = sadd.s32 %s43, 1
    %p47 = scmp.eq.s32.totalorder %s9, 1
    %p48 = scmp.ne.s32.totalorder %s43, %s45
    %p49 = scmp.eq.s32.totalorder %s9, 0
    %p50 = por %p48, %p49
    %p51 = scmp.ne.s32.totalorder %s43, %s45
    %p52 = scmp.eq.s32.totalorder %s14, 1
    %p53 = por %p51, %p52
    %p54 = scmp.ne.s32.totalorder %s45, %s46
    %p55 = scmp.eq.s32.totalorder %s14, 0
    %p56 = por %p54, %p55
    %p57 = scmp.ne.s32.totalorder %s45, %s46
    %p58 = scmp.eq.s32.totalorder %s15, 1
    %p59 = por %p57, %p58
    %p61 = scmp.ne.s32.totalorder %s46, %s60
    %p62 = scmp.eq.s32.totalorder %s15, 0
    %p63 = por %p61, %p62
    %s65 = sadd.s32 %s64, 1
    %p68 = scmp.eq.s32.totalorder %s9, 1
    %p69 = scmp.ne.s32.totalorder %s64, %s66
    %p70 = scmp.eq.s32.totalorder %s9, 0
    %p71 = por %p69, %p70
    %p72 = scmp.ne.s32.totalorder %s64, %s66
    %p73 = scmp.eq.s32.totalorder %s14, 1
    %p74 = por %p72, %p73
    %p75 = scmp.ne.s32.totalorder %s66, %s67
    %p76 = scmp.eq.s32.totalorder %s14, 0
    %p77 = por %p75, %p76
    %p78 = scmp.ne.s32.totalorder %s66, %s67
    %p79 = scmp.eq.s32.totalorder %s15, 1
    %p80 = por %p78, %p79
    %p82 = scmp.ne.s32.totalorder %s67, %s81
    %p83 = scmp.eq.s32.totalorder %s15, 0
    %p84 = por %p82, %p83
    %s85 = ssub.s32 %s9, %s16
    %p86 = scmp.eq.s32.totalorder %s85, 0
    %s88 = sadd.s32 %s87, 1
    %s89 = scalar_select %p86, %s87, %s88
    %p92 = pneg %p86
    %p93 = scmp.eq.s32.totalorder %s9, 1
    %p94 = por %p92, %p93
    %p95 = scmp.ne.s32.totalorder %s87, %s90
    %p96 = scmp.eq.s32.totalorder %s9, 0
    %p97 = por %p95, %p96
    %p98 = scmp.ne.s32.totalorder %s87, %s90
    %p99 = scmp.eq.s32.totalorder %s14, 1
    %p100 = por %p98, %p99
    %p101 = scmp.ne.s32.totalorder %s90, %s91
    %p102 = scmp.eq.s32.totalorder %s14, 0
    %p103 = por %p101, %p102
    %p104 = scmp.ne.s32.totalorder %s90, %s91
    %p105 = scmp.eq.s32.totalorder %s15, 1
    %p106 = por %p104, %p105
    %p108 = scmp.ne.s32.totalorder %s91, %s107
    %p109 = scmp.eq.s32.totalorder %s15, 0
    %p110 = por %p108, %p109
    %p111 = scmp.le.s32.totalorder 1, %s9
    %p112 = scmp.lt.s32.totalorder %s9, 3
    %p113 = pnand %p111, %p112
    %p114 = pneg %p113
    // Predicated region
    $region9: #{position_embedding_sine.2} parent=5 // pred_check
      _
    $region10: #{position_embedding_sine.2} parent=5 // pred_check_branch
      %116 = sbr.rel (%p113) target = $region12
    $region11: #{position_embedding_sine.2} parent=5 // pred_region
      %s117 = ssub.s32 %s9, 1
      // Predicated region
      $region13: #{position_embedding_sine.2} parent=11 // pred_check
        %p118 = pneg %p56
      $region14: #{position_embedding_sine.2} parent=11 // pred_check_branch
        %120 = sbr.rel (%p118) target = $region16
      $region15: #{position_embedding_sine.2} parent=11 // pred_region
        _
      $region16: #{position_embedding_sine.2} parent=11 // pred_fallthru
        _
      // Predicated region
      $region17: #{position_embedding_sine.2} parent=11 // pred_check
        %p121 = pneg %p77
      $region18: #{position_embedding_sine.2} parent=11 // pred_check_branch
        %123 = sbr.rel (%p121) target = $region20
      $region19: #{position_embedding_sine.2} parent=11 // pred_region
        _
      $region20: #{position_embedding_sine.2} parent=11 // pred_fallthru
        _
    $region12: #{position_embedding_sine.2} parent=5 // pred_fallthru
      _
    %p124 = scmp.lt.s32.totalorder %s9, 2
    // Predicated region
    $region21: #{position_embedding_sine.2} parent=5 // pred_check
      %p125 = pneg %p124
    $region22: #{position_embedding_sine.2} parent=5 // pred_check_branch
      %127 = sbr.rel (%p125) target = $region24
    $region23: #{position_embedding_sine.2} parent=5 // pred_region
      // Predicated region
      $region25: #{position_embedding_sine.2} parent=23 // pred_check
        %p128 = pneg %p29
      $region26: #{position_embedding_sine.2} parent=23 // pred_check_branch
        %130 = sbr.rel (%p128) target = $region28
      $region27: #{position_embedding_sine.2} parent=23 // pred_region
        %p131 = scmp.lt.s32.totalorder %s9, 1
        %s132 = scalar_select %p131, %s9, 1
        %s133 = smul.addr %s132, 2
        %s134 = smul.addr %s133, 8
        %s135 = scalar_lea.vmem %s0, %s134
      $region28: #{position_embedding_sine.2} parent=23 // pred_fallthru
        _
    $region24: #{position_embedding_sine.2} parent=5 // pred_fallthru
      _
    %p136 = scmp.le.s32.totalorder 1, %s9
    %p137 = scmp.lt.s32.totalorder %s9, 3
    %p138 = pnand %p136, %p137
    %p139 = pneg %p138
    // Predicated region
    $region29: #{position_embedding_sine.2} parent=5 // pred_check
      _
    $region30: #{position_embedding_sine.2} parent=5 // pred_check_branch
      %141 = sbr.rel (%p138) target = $region32
    $region31: #{position_embedding_sine.2} parent=5 // pred_region
      %s142 = ssub.s32 %s9, 1
      %p143 = scmp.lt.s32.totalorder %s14, 1
      %s144 = scalar_select %p143, %s14, 1
      %s145 = smul.addr %s144, 2
      %s146 = smul.addr %s145, 8
      %s147 = scalar_lea.vmem %s0, %s146
      %p148 = pneg %p35
      %p149 = pneg %p32
      %p150 = pneg %p56
      %p151 = pneg %p53
      %p152 = pneg %p77
      %p153 = pneg %p74
      %p154 = pneg %p103
      %p155 = pneg %p100
      %p156 = scmp.lt.s32.totalorder %s14, 1
      %s157 = scalar_select %p156, %s14, 1
      %s158 = smul.addr %s157, 4
      %s159 = smul.addr %s158, 8
      %s160 = scalar_lea.vmem %s3, %s159
      %p161 = scmp.lt.s32.totalorder %s14, 1
      %s162 = scalar_select %p161, %s14, 1
      %s163 = smul.addr %s162, 2
      %s164 = smul.addr %s163, 8
      %s165 = scalar_lea.vmem %s0, %s164
      %p166 = scmp.lt.s32.totalorder %s14, 1
      %s167 = scalar_select %p166, %s14, 1
      %s168 = smul.addr %s167, 4
      %s169 = smul.addr %s168, 8
      %s170 = scalar_lea.vmem %s3, %s169
      %v172 = vld [vmem:[%s165] sm:$0xff]
      %v173 = vld [vmem:[%s165 + $0x8] sm:$0xff]
      %v174 = vsub.s32 1, %v172
      %v175 = vsub.s32 1, %v173
      %v176 = vcvt.s32.f32 %v174
      %v177 = vcvt.s32.f32 %v175
      %v178 = vpack.c.bf16 %v177, %v176
      %v179 = vld [vmem:[%s1] sm:$0xf]
      %v180 = vld [vmem:[%s1 + $0x4] sm:$0xf]
      %v183 = vunpack.c.l.b16 %v179
      %v184 = vunpack.c.l.b16 %v180
      %v185 = vpack.c.b16 %v184, %v183
      %vm186 = vcmask 130048
      %v188 = vsel %vm186, %v185, 0
      %190 = vmatprep.subr.bf16.mxu0 0
      %191 = vmatpush1.bf16.msra.mxu0 %v178
      %192 = vmatprep.subr.bf16.mxu0 0
      %193 = vmatpush1.bf16.msra.mxu0 0
      %194 = vmatprep.subr.bf16.mxu0 0
      %195 = vmatpush1.bf16.msra.mxu0 0
      %196 = vmatprep.subr.bf16.mxu0 0
      %197 = vmatpush1.bf16.msra.mxu0 0
      %198 = vmatprep.subr.bf16.mxu0 0
      %199 = vmatpush1.bf16.msra.mxu0 0
      %200 = vmatprep.subr.bf16.mxu0 0
      %201 = vmatpush1.bf16.msra.mxu0 0
      %202 = vmatprep.subr.bf16.mxu0 0
      %203 = vmatpush1.bf16.msra.mxu0 0
      %204 = vmatprep.subr.bf16.mxu0 0
      %205 = vmatpush1.bf16.msra.mxu0 0
      %206 = vmatprep.subr.bf16.mxu0 0
      %207 = vmatpush1.bf16.msra.mxu0 0
      %208 = vmatprep.subr.bf16.mxu0 0
      %209 = vmatpush1.bf16.msra.mxu0 0
      %210 = vmatprep.subr.bf16.mxu0 0
      %211 = vmatpush1.bf16.msra.mxu0 0
      %212 = vmatprep.subr.bf16.mxu0 0
      %213 = vmatpush1.bf16.msra.mxu0 0
      %214 = vmatprep.subr.bf16.mxu0 0
      %215 = vmatpush1.bf16.msra.mxu0 0
      %216 = vmatprep.subr.bf16.mxu0 0
      %217 = vmatpush1.bf16.msra.mxu0 0
      %218 = vmatprep.subr.bf16.mxu0 0
      %219 = vmatpush1.bf16.msra.mxu0 0
      %220 = vmatprep.subr.bf16.mxu0 0
      %221 = vmatpush1.bf16.msra.mxu0 0
      %222 = vmatprep.mubr.bf16.mxu0 0
      %223 = vmatmul.mubr.bf16.gmra.mrb[0].mxu0 %v188
      %v224 = vpop.f32.mrb[0].mxu0
      %v225 = vadd.f32 0.0, %v224
      %v226 = vpop.f32.mrb[0].mxu0
      %v227 = vpop.f32.mrb[0].mxu0
      %v228 = vadd.f32 0.0, %v227
      %v229 = vpop.f32.mrb[0].mxu0
      %230 = vdwg.mxu0
      %v231 = vld [vmem:[%s2] sm:$0xf]
      %v232 = vld [vmem:[%s2 + $0x4] sm:$0xf]
      %v235 = vunpack.c.l.b16 %v231
      %v236 = vunpack.c.l.b16 %v232
      %v237 = vpack.c.b16 %v236, %v235
      %v240 = vsel %vm186, %v178, 0
      %242 = vmatprep.subr.bf16.mxu0 0
      %243 = vmatpush1.bf16.msra.mxu0 %v237
      %244 = vmatprep.subr.bf16.mxu0 0
      %245 = vmatpush1.bf16.msra.mxu0 0
      %246 = vmatprep.subr.bf16.mxu0 0
      %247 = vmatpush1.bf16.msra.mxu0 0
      %248 = vmatprep.subr.bf16.mxu0 0
      %249 = vmatpush1.bf16.msra.mxu0 0
      %250 = vmatprep.subr.bf16.mxu0 0
      %251 = vmatpush1.bf16.msra.mxu0 0
      %252 = vmatprep.subr.bf16.mxu0 0
      %253 = vmatpush1.bf16.msra.mxu0 0
      %254 = vmatprep.subr.bf16.mxu0 0
      %255 = vmatpush1.bf16.msra.mxu0 0
      %256 = vmatprep.subr.bf16.mxu0 0
      %257 = vmatpush1.bf16.msra.mxu0 0
      %258 = vmatprep.subr.bf16.mxu0 0
      %259 = vmatpush1.bf16.msra.mxu0 0
      %260 = vmatprep.subr.bf16.mxu0 0
      %261 = vmatpush1.bf16.msra.mxu0 0
      %262 = vmatprep.subr.bf16.mxu0 0
      %263 = vmatpush1.bf16.msra.mxu0 0
      %264 = vmatprep.subr.bf16.mxu0 0
      %265 = vmatpush1.bf16.msra.mxu0 0
      %266 = vmatprep.subr.bf16.mxu0 0
      %267 = vmatpush1.bf16.msra.mxu0 0
      %268 = vmatprep.subr.bf16.mxu0 0
      %269 = vmatpush1.bf16.msra.mxu0 0
      %270 = vmatprep.subr.bf16.mxu0 0
      %271 = vmatpush1.bf16.msra.mxu0 0
      %272 = vmatprep.subr.bf16.mxu0 0
      %273 = vmatpush1.bf16.msra.mxu0 0
      %274 = vmatprep.mubr.bf16.mxu0 0
      %275 = vmatmul.mubr.bf16.gmra.mrb[0].mxu0 %v240
      %v276 = vpop.f32.mrb[0].mxu0
      %v277 = vadd.f32 0.0, %v276
      %v278 = vpop.f32.mrb[0].mxu0
      %v279 = vpop.f32.mrb[0].mxu0
      %v280 = vadd.f32 0.0, %v279
      %v281 = vpop.f32.mrb[0].mxu0
      %282 = vdwg.mxu0
      %283 = vst.msk [vmem:[%s170] sm:$0xff] %vm186, %v225
      %284 = vst.msk [vmem:[%s170 + $0x8] sm:$0xff] %vm186, %v228
      %s285 = scalar_lea.vmem %s170, 16
      %286 = vst.msk [vmem:[%s285] sm:$0xff] %vm186, %v277
      %287 = vst.msk [vmem:[%s285 + $0x8] sm:$0xff] %vm186, %v280
      %p288 = scmp.lt.s32.totalorder %s14, 1
      %s289 = scalar_select %p288, %s14, 1
      %s290 = smul.addr %s289, 4
      %s291 = smul.addr %s290, 8
      %s292 = scalar_lea.vmem %s3, %s291
      // Predicated region
      $region33: #{position_embedding_sine.2} parent=31 // pred_check
        %p293 = pneg %p100
      $region34: #{position_embedding_sine.2} parent=31 // pred_check_branch
        %295 = sbr.rel (%p293) target = $region36
      $region35: #{position_embedding_sine.2} parent=31 // pred_region
        _
      $region36: #{position_embedding_sine.2} parent=31 // pred_fallthru
        _
    $region32: #{position_embedding_sine.2} parent=5 // pred_fallthru
      _
    %p296 = scmp.le.s32.totalorder 2, %s9
    // Predicated region
    $region37: #{position_embedding_sine.2} parent=5 // pred_check
      %p297 = pneg %p296
    $region38: #{position_embedding_sine.2} parent=5 // pred_check_branch
      %299 = sbr.rel (%p297) target = $region40
    $region39: #{position_embedding_sine.2} parent=5 // pred_region
      %s300 = ssub.s32 %s9, 2
      // Predicated region
      $region41: #{position_embedding_sine.2} parent=39 // pred_check
        %p301 = pneg %p106
      $region42: #{position_embedding_sine.2} parent=39 // pred_check_branch
        %303 = sbr.rel (%p301) target = $region44
      $region43: #{position_embedding_sine.2} parent=39 // pred_region
        %p304 = scmp.lt.s32.totalorder %s15, 1
        %s305 = scalar_select %p304, %s15, 1
        %s306 = smul.addr %s305, 4
        %s307 = smul.addr %s306, 8
        %s308 = scalar_lea.vmem %s3, %s307
      $region44: #{position_embedding_sine.2} parent=39 // pred_fallthru
        _
    $region40: #{position_embedding_sine.2} parent=5 // pred_fallthru
      _
  $region6: #{position_embedding_sine.2} parent=0 // loop_footer
    %s13 = sadd.s32 1, %s9
  $region7: #{position_embedding_sine.2} parent=0 // loop_footer_branch
    %8 = sbr.rel target = $region3
  $region8: #{position_embedding_sine.2} parent=0 // loop_exit
    _

// kernel: position_embedding_sine.3
$region0: #{position_embedding_sine.3}
  #allocation0 [shape = 'u32[]', space=smem, size = 0x4, offset = 0x4, fixed_abs, tag = 'smem constant byte address 0x4 - core index']
  #allocation1 [shape = 'u32[144,128]{1,0:T(1,128)}', space=vmem, size = 0x12000, scoped, tag = 'internal scratch']
  %s0 = inlined_call_operand.vmem [shape: f32[2,2,256], index: 0, kind: input, shape index: {}]
  %s1 = inlined_call_operand.vmem [shape: f32[32,1], index: 1, kind: input, shape index: {}]
  %s2 = inlined_call_operand.vmem [shape: f32[32,1], index: 2, kind: input, shape index: {}]
  %s3 = inlined_call_operand.vmem [shape: f32[2,32,256], index: 3, kind: output, shape index: {}]
  %s4 = sld [smem:[#allocation0]]
  $region45: #{position_embedding_sine.3} parent=0
    _
  %s6 = ssub.s32 1, %s4
  %s7 = scalar_select 0, %s6, %s4
  loop: start=0, step=1, limit=6
  $region2: #{position_embedding_sine.3} parent=0 // loop_pre_header
    _
  $region3: #{position_embedding_sine.3} parent=0 // loop_header
    %s9 = sphi 0, %s13
    %p10 = scmp.ge.s32.totalorder %s9, 6
    %s16 = sphi 0, %s28
    %s17 = sphi 0, %s24
    %s18 = sphi 0, %s16
    %s19 = sphi 0, %s17
    %s20 = sphi 0, %s18
    %s21 = sphi 0, %s19
    %s31 = sphi 0, %s33
    %s34 = sphi 0, %s31
    %s35 = sphi 0, %s34
    %s51 = sphi 0, %s35
    %s57 = sphi 0, %s59
    %s60 = sphi 0, %s57
    %s61 = sphi 0, %s60
    %s77 = sphi 0, %s61
    %s83 = sphi 0, %s85
    %s86 = sphi 0, %s83
    %s87 = sphi 0, %s86
    %s103 = sphi 0, %s87
    %s111 = sphi 0, %s113
    %s114 = sphi 0, %s111
    %s115 = sphi 0, %s114
    %s131 = sphi 0, %s115
  $region4: #{position_embedding_sine.3} parent=0 // loop_header_branch
    %12 = sbr.rel (%p10) target = $region8
  $region5: #{position_embedding_sine.3} parent=0 // loop_body
    %s14 = ssub.s32 %s9, 1
    %s15 = ssub.s32 %s9, 2
    %s22 = sadd.s32 1, %s17
    %p23 = scmp.ge.s32.totalorder %s22, 2
    %s24 = scalar_select %p23, 0, %s22
    %s25 = sadd.s32 1, %s16
    %s26 = scalar_select %p23, %s25, %s16
    %p27 = scmp.ge.s32.totalorder %s26, 2
    %s28 = scalar_select %p27, 0, %s26
    %s29 = ssub.s32 %s16, %s28
    %p30 = scmp.eq.s32.totalorder %s29, 0
    %s32 = sadd.s32 %s31, 1
    %s33 = scalar_select %p30, %s31, %s32
    %p36 = pneg %p30
    %p37 = scmp.eq.s32.totalorder %s9, 3
    %p38 = por %p36, %p37
    %p39 = scmp.ne.s32.totalorder %s31, %s34
    %p40 = scmp.eq.s32.totalorder %s9, 0
    %p41 = por %p39, %p40
    %p42 = scmp.ne.s32.totalorder %s31, %s34
    %p43 = scmp.eq.s32.totalorder %s14, 3
    %p44 = por %p42, %p43
    %p45 = scmp.ne.s32.totalorder %s34, %s35
    %p46 = scmp.eq.s32.totalorder %s14, 0
    %p47 = por %p45, %p46
    %p48 = scmp.ne.s32.totalorder %s34, %s35
    %p49 = scmp.eq.s32.totalorder %s15, 3
    %p50 = por %p48, %p49
    %p52 = scmp.ne.s32.totalorder %s35, %s51
    %p53 = scmp.eq.s32.totalorder %s15, 0
    %p54 = por %p52, %p53
    %s55 = ssub.s32 %s17, %s24
    %p56 = scmp.eq.s32.totalorder %s55, 0
    %s58 = sadd.s32 %s57, 1
    %s59 = scalar_select %p56, %s57, %s58
    %p62 = pneg %p56
    %p63 = scmp.eq.s32.totalorder %s9, 3
    %p64 = por %p62, %p63
    %p65 = scmp.ne.s32.totalorder %s57, %s60
    %p66 = scmp.eq.s32.totalorder %s9, 0
    %p67 = por %p65, %p66
    %p68 = scmp.ne.s32.totalorder %s57, %s60
    %p69 = scmp.eq.s32.totalorder %s14, 3
    %p70 = por %p68, %p69
    %p71 = scmp.ne.s32.totalorder %s60, %s61
    %p72 = scmp.eq.s32.totalorder %s14, 0
    %p73 = por %p71, %p72
    %p74 = scmp.ne.s32.totalorder %s60, %s61
    %p75 = scmp.eq.s32.totalorder %s15, 3
    %p76 = por %p74, %p75
    %p78 = scmp.ne.s32.totalorder %s61, %s77
    %p79 = scmp.eq.s32.totalorder %s15, 0
    %p80 = por %p78, %p79
    %s81 = ssub.s32 %s17, %s24
    %p82 = scmp.eq.s32.totalorder %s81, 0
    %s84 = sadd.s32 %s83, 1
    %s85 = scalar_select %p82, %s83, %s84
    %p88 = pneg %p82
    %p89 = scmp.eq.s32.totalorder %s9, 3
    %p90 = por %p88, %p89
    %p91 = scmp.ne.s32.totalorder %s83, %s86
    %p92 = scmp.eq.s32.totalorder %s9, 0
    %p93 = por %p91, %p92
    %p94 = scmp.ne.s32.totalorder %s83, %s86
    %p95 = scmp.eq.s32.totalorder %s14, 3
    %p96 = por %p94, %p95
    %p97 = scmp.ne.s32.totalorder %s86, %s87
    %p98 = scmp.eq.s32.totalorder %s14, 0
    %p99 = por %p97, %p98
    %p100 = scmp.ne.s32.totalorder %s86, %s87
    %p101 = scmp.eq.s32.totalorder %s15, 3
    %p102 = por %p100, %p101
    %p104 = scmp.ne.s32.totalorder %s87, %s103
    %p105 = scmp.eq.s32.totalorder %s15, 0
    %p106 = por %p104, %p105
    %s107 = ssub.s32 %s16, %s28
    %s108 = ssub.s32 %s17, %s24
    %s109 = sor.u32 %s107, %s108
    %p110 = scmp.eq.s32.totalorder %s109, 0
    %s112 = sadd.s32 %s111, 1
    %s113 = scalar_select %p110, %s111, %s112
    %p116 = pneg %p110
    %p117 = scmp.eq.s32.totalorder %s9, 3
    %p118 = por %p116, %p117
    %p119 = scmp.ne.s32.totalorder %s111, %s114
    %p120 = scmp.eq.s32.totalorder %s9, 0
    %p121 = por %p119, %p120
    %p122 = scmp.ne.s32.totalorder %s111, %s114
    %p123 = scmp.eq.s32.totalorder %s14, 3
    %p124 = por %p122, %p123
    %p125 = scmp.ne.s32.totalorder %s114, %s115
    %p126 = scmp.eq.s32.totalorder %s14, 0
    %p127 = por %p125, %p126
    %p128 = scmp.ne.s32.totalorder %s114, %s115
    %p129 = scmp.eq.s32.totalorder %s15, 3
    %p130 = por %p128, %p129
    %p132 = scmp.ne.s32.totalorder %s115, %s131
    %p133 = scmp.eq.s32.totalorder %s15, 0
    %p134 = por %p132, %p133
    %p135 = scmp.le.s32.totalorder 1, %s9
    %p136 = scmp.lt.s32.totalorder %s9, 5
    %p137 = pnand %p135, %p136
    %p138 = pneg %p137
    // Predicated region
    $region9: #{position_embedding_sine.3} parent=5 // pred_check
      _
    $region10: #{position_embedding_sine.3} parent=5 // pred_check_branch
      %140 = sbr.rel (%p137) target = $region12
    $region11: #{position_embedding_sine.3} parent=5 // pred_region
      %s141 = ssub.s32 %s9, 1
    $region12: #{position_embedding_sine.3} parent=5 // pred_fallthru
      _
    %p142 = scmp.lt.s32.totalorder %s9, 4
    // Predicated region
    $region13: #{position_embedding_sine.3} parent=5 // pred_check
      %p143 = pneg %p142
    $region14: #{position_embedding_sine.3} parent=5 // pred_check_branch
      %145 = sbr.rel (%p143) target = $region16
    $region15: #{position_embedding_sine.3} parent=5 // pred_region
      // Predicated region
      $region17: #{position_embedding_sine.3} parent=15 // pred_check
        %p146 = pneg %p41
      $region18: #{position_embedding_sine.3} parent=15 // pred_check_branch
        %148 = sbr.rel (%p146) target = $region20
      $region19: #{position_embedding_sine.3} parent=15 // pred_region
        %p149 = scmp.lt.s32.totalorder %s16, 1
        %s150 = scalar_select %p149, %s16, 1
        %s151 = smul.addr %s150, 2
        %s152 = smul.addr %s151, 2
        %s153 = scalar_lea.vmem %s0, %s152
      $region20: #{position_embedding_sine.3} parent=15 // pred_fallthru
        _
      // Predicated region
      $region21: #{position_embedding_sine.3} parent=15 // pred_check
        %p154 = pneg %p67
      $region22: #{position_embedding_sine.3} parent=15 // pred_check_branch
        %156 = sbr.rel (%p154) target = $region24
      $region23: #{position_embedding_sine.3} parent=15 // pred_region
        %s157 = smul.u32 2, %s17
        %p158 = scmp.lt.s32.totalorder %s157, 3
        %s159 = scalar_select %p158, %s157, 3
        %s160 = smul.addr %s159, 8
        %s161 = scalar_lea.vmem %s1, %s160
        %s162 = smul.u32 2, %s17
      $region24: #{position_embedding_sine.3} parent=15 // pred_fallthru
        _
      // Predicated region
      $region25: #{position_embedding_sine.3} parent=15 // pred_check
        %p163 = pneg %p93
      $region26: #{position_embedding_sine.3} parent=15 // pred_check_branch
        %165 = sbr.rel (%p163) target = $region28
      $region27: #{position_embedding_sine.3} parent=15 // pred_region
        %s166 = smul.u32 2, %s17
        %p167 = scmp.lt.s32.totalorder %s166, 3
        %s168 = scalar_select %p167, %s166, 3
        %s169 = smul.addr %s168, 8
        %s170 = scalar_lea.vmem %s2, %s169
        %s171 = smul.u32 2, %s17
      $region28: #{position_embedding_sine.3} parent=15 // pred_fallthru
        _
    $region16: #{position_embedding_sine.3} parent=5 // pred_fallthru
      _
    %p172 = scmp.le.s32.totalorder 1, %s9
    %p173 = scmp.lt.s32.totalorder %s9, 5
    %p174 = pnand %p172, %p173
    %p175 = pneg %p174
    // Predicated region
    $region29: #{position_embedding_sine.3} parent=5 // pred_check
      _
    $region30: #{position_embedding_sine.3} parent=5 // pred_check_branch
      %177 = sbr.rel (%p174) target = $region32
    $region31: #{position_embedding_sine.3} parent=5 // pred_region
      %s178 = ssub.s32 %s9, 1
      %p179 = scmp.lt.s32.totalorder %s18, 1
      %s180 = scalar_select %p179, %s18, 1
      %s181 = smul.addr %s180, 2
      %s182 = smul.addr %s181, 2
      %s183 = scalar_lea.vmem %s0, %s182
      %p184 = pneg %p47
      %p185 = pneg %p44
      %s186 = smul.u32 2, %s19
      %p187 = scmp.lt.s32.totalorder %s186, 3
      %s188 = scalar_select %p187, %s186, 3
      %s189 = smul.addr %s188, 8
      %s190 = scalar_lea.vmem %s1, %s189
      %p191 = pneg %p73
      %p192 = pneg %p70
      %s193 = smul.u32 2, %s19
      %p194 = scmp.lt.s32.totalorder %s193, 3
      %s195 = scalar_select %p194, %s193, 3
      %s196 = smul.addr %s195, 8
      %s197 = scalar_lea.vmem %s2, %s196
      %p198 = pneg %p99
      %p199 = pneg %p96
      %p200 = pneg %p127
      %p201 = pneg %p124
      %s202 = smul.u32 2, %s19
      %p203 = scmp.lt.s32.totalorder %s18, 1
      %s204 = scalar_select %p203, %s18, 1
      %p205 = scmp.lt.s32.totalorder %s202, 3
      %s206 = scalar_select %p205, %s202, 3
      %s207 = smul.addr %s206, 2
      %s208 = smul.addr %s204, 8
      %s209 = sadd.s32 %s207, %s208
      %s210 = smul.addr %s209, 8
      %s211 = scalar_lea.vmem %s3, %s210
      %p212 = scmp.lt.s32.totalorder %s18, 1
      %s213 = scalar_select %p212, %s18, 1
      %s214 = smul.addr %s213, 2
      %s215 = smul.addr %s214, 2
      %s216 = scalar_lea.vmem %s0, %s215
      %s217 = smul.u32 2, %s19
      %p218 = scmp.lt.s32.totalorder %s217, 3
      %s219 = scalar_select %p218, %s217, 3
      %s220 = smul.addr %s219, 8
      %s221 = scalar_lea.vmem %s1, %s220
      %s222 = smul.u32 2, %s19
      %s223 = smul.u32 2, %s19
      %p224 = scmp.lt.s32.totalorder %s223, 3
      %s225 = scalar_select %p224, %s223, 3
      %s226 = smul.addr %s225, 8
      %s227 = scalar_lea.vmem %s2, %s226
      %s228 = smul.u32 2, %s19
      %s229 = smul.u32 2, %s19
      %p230 = scmp.lt.s32.totalorder %s18, 1
      %s231 = scalar_select %p230, %s18, 1
      %p232 = scmp.lt.s32.totalorder %s229, 3
      %s233 = scalar_select %p232, %s229, 3
      %s234 = smul.addr %s233, 2
      %s235 = smul.addr %s231, 8
      %s236 = sadd.s32 %s234, %s235
      %s237 = smul.addr %s236, 8
      %s238 = scalar_lea.vmem %s3, %s237
      %s239 = smul.u32 2, %s19
      %p240 = scmp.lt.s32.totalorder %s19, 1
      %v241 = vld [vmem:[%s216] ss:$2 sm:$0x3]
      %s242 = scalar_lea.vmem %s216, 1
      %v243 = vld [vmem:[%s242] ss:$2 sm:$0x3]
      %s244 = scalar_select %p240, 1, 0
      %v245 = vstv %s244
      %vm246 = vcmp.eq.s32.totalorder %v245, 1
      %v247 = vsel %vm246, %v241, %v243
      %v248 = vld [vmem:[%s221] sm:$0xff]
      %v249 = vld [vmem:[%s221 + $0x8] sm:$0xff]
      %v251 = vlaneseq
      %v252 = vshrl.u32 %v251, 7
      %v253 = vsub.s32 0, %v252
      %v254 = vrot.slane %v247, %v253
      %v255 = vlaneseq
      %v256 = vshrl.u32 %v255, 7
      %v257 = vsub.s32 1, %v256
      %v258 = vrot.slane %v247, %v257
      %262 = vset.pattern.permute.xlu0 0
      %263 = vperm.xlu0 %262, %v248
      %v264 = vpop.permute.xlu0 %263
      %267 = vset.pattern.permute.xlu0 0
      %268 = vperm.xlu0 %267, %v249
      %v269 = vpop.permute.xlu0 %268
      %v271 = vmul.f32 %v254, %v264
      %v272 = vmul.f32 %v258, %v264
      %v273 = vmul.f32 %v254, %v269
      %v274 = vmul.f32 %v258, %v269
      %v275 = vld [vmem:[%s227] sm:$0xff]
      %v276 = vld [vmem:[%s227 + $0x8] sm:$0xff]
      %278 = vset.pattern.permute.xlu0 0
      %279 = vperm.xlu0 %278, %v275
      %v280 = vpop.permute.xlu0 %279
      %283 = vset.pattern.permute.xlu0 0
      %284 = vperm.xlu0 %283, %v276
      %v285 = vpop.permute.xlu0 %284
      %v287 = vadd.f32 %v271, %v280
      %v288 = vadd.f32 %v272, %v280
      %v289 = vadd.f32 %v273, %v285
      %v290 = vadd.f32 %v274, %v285
      %v291 = vand.u32 2147483647, %v287
      %vm292 = vcmp.le.f32.partialorder %v291, 0.7853982
      %vm293 = vcmp.lt.s32.totalorder %v287, 0
      %v294 = vand.u32 %v287, 2139095040
      %v295 = vshrl.u32 %v294, 23
      %v296 = vsub.s32 %v295, 127
      %v297 = vand.u32 2147483647, %v287
      %v298 = vand.u32 %v297, 8388607
      %v299 = vor.u32 %v298, 8388608
      %v300 = vsub.s32 0, %v299
      %v301 = vadd.s32 %v296, 1
      %vm302 = vcmp.gt.s32.totalorder %v301, 0
      %v303 = vsel %vm302, %v301, 0
      %v304 = vshrl.u32 %v303, 5
      %v305 = vand.u32 %v303, 31
      %v306 = vsub.s32 32, %v305
      %v307 = vshrl.u32 683565275, %v306
      %v308 = vshll.u32 683565275, %v305
      %v309 = vshrl.u32 2475754826, %v306
      %v310 = vor.u32 %v308, %v309
      %v311 = vshll.u32 2475754826, %v305
      %v312 = vshrl.u32 2131351028, %v306
      %v313 = vor.u32 %v311, %v312
      %v314 = vshll.u32 2131351028, %v305
      %v315 = vshrl.u32 2102212464, %v306
      %v316 = vor.u32 %v314, %v315
      %v317 = vshll.u32 2102212464, %v305
      %v318 = vshrl.u32 920167782, %v306
      %v319 = vor.u32 %v317, %v318
      %v320 = vshll.u32 920167782, %v305
      %v321 = vshrl.u32 1326507024, %v306
      %v322 = vor.u32 %v320, %v321
      %vm323 = vcmp.lt.s32.totalorder %v304, 1
      %vm324 = vcmp.lt.s32.totalorder %v304, 2
      %vm325 = vcmp.lt.s32.totalorder %v304, 3
      %vm326 = vcmp.lt.s32.totalorder %v304, 4
      %v327 = vsel %vm323, %v307, %v310
      %v328 = vsel %vm326, %v316, 2102212464
      %v329 = vsel %vm325, %v313, %v328
      %v330 = vsel %vm324, %v327, %v329
      %v331 = vsel %vm323, %v310, %v313
      %v332 = vsel %vm326, %v319, 920167782
      %v333 = vsel %vm325, %v316, %v332
      %v334 = vsel %vm324, %v331, %v333
      %v335 = vsel %vm323, %v313, %v316
      %v336 = vsel %vm326, %v322, 1326507024
      %v337 = vsel %vm325, %v319, %v336
      %v338 = vsel %vm324, %v335, %v337
      %v339 = vshll.u32 %v299, 8
      %v340 = vmul.u32.u64.compose %v339, %v338
      %v341 = vextract.low.u32 %v340
      %v342 = vextract.high.u32 %v340
      %v343 = vmul.u32.u64.compose %v339, %v334
      %v344 = vextract.low.u32 %v343
      %v345 = vextract.high.u32 %v343
      %v346 = vmul.u32 %v339, %v330
      %v347 = vadd.s32 %v342, %v344
      %vm348 = vc.u32 %v342, %v344
      %v349 = vadd.s32 %v345, 1
      %v350 = vsel %vm348, %v349, %v345
      %v351 = vadd.s32 %v346, %v350
      %v352 = vadd.s32 %v351, 536870912
      %v353 = vshrl.u32 %v352, 30
      %v354 = vshll.u32 %v353, 30
      %v355 = vsub.s32 %v351, %v354
      %vm356 = vcmp.lt.s32.totalorder %v355, 0
      %v357 = vsub.s32 0, %v355
      %v358 = vsel %vm356, %v357, %v355
      %v359 = vclz %v358
      %v360 = vsub.s32 %v359, 2
      %vm361 = vcmp.gt.s32.totalorder 0, %v360
      %v362 = vsel %vm361, 0, %v360
      %v363 = vsub.s32 32, %v362
      %v364 = vshll.u32 %v355, %v362
      %v365 = vshrl.u32 %v347, %v363
      %v366 = vor.u32 %v364, %v365
      %v367 = vsub.s32 4294967266, %v362
      %v368 = vadd.s32 %v367, 127
      %v369 = vshll.u32 %v368, 23
      %v370 = vor.u32 4788187, %v369
      %v371 = vand.u32 2147483647, %v370
      %v373 = vcvt.s32.f32 %v366
      %v374 = vmul.f32 %v373, %v371
      %v375 = vxor.u32 %v374, 2147483648
      %v376 = vsel %vm293, %v375, %v374
      %v377 = vsub.s32 4, %v353
      %v378 = vsel %vm293, %v377, %v353
      %v379 = vsel %vm292, %v287, %v376
      %v380 = vsel %vm292, 0, %v378
      %v381 = vcosq.f32.pop %v379
      %v382 = vsinq.f32.pop %v379
      %vm383 = vweird.f32 %v287
      %v384 = vadd.s32 %v380, 3
      %v385 = vand.u32 %v384, 3
      %vm386 = vcmp.lt.s32.totalorder %v385, 2
      %vm387 = vcmp.eq.s32.totalorder %v385, 0
      %v388 = vxor.u32 %v382, 2147483648
      %v389 = vsel %vm387, %v381, %v388
      %vm390 = vcmp.eq.s32.totalorder %v385, 2
      %v391 = vxor.u32 %v381, 2147483648
      %v392 = vsel %vm390, %v391, %v382
      %v393 = vsel %vm386, %v389, %v392
      %v394 = vsel %vm383, nan, %v393
      %v395 = vand.u32 2147483647, %v288
      %vm396 = vcmp.le.f32.partialorder %v395, 0.7853982
      %vm397 = vcmp.lt.s32.totalorder %v288, 0
      %v398 = vand.u32 %v288, 2139095040
      %v399 = vshrl.u32 %v398, 23
      %v400 = vsub.s32 %v399, 127
      %v401 = vand.u32 2147483647, %v288
      %v402 = vand.u32 %v401, 8388607
      %v403 = vor.u32 %v402, 8388608
      %v404 = vsub.s32 0, %v403
      %v405 = vadd.s32 %v400, 1
      %vm406 = vcmp.gt.s32.totalorder %v405, 0
      %v407 = vsel %vm406, %v405, 0
      %v408 = vshrl.u32 %v407, 5
      %v409 = vand.u32 %v407, 31
      %v410 = vsub.s32 32, %v409
      %v411 = vshrl.u32 683565275, %v410
      %v412 = vshll.u32 683565275, %v409
      %v413 = vshrl.u32 2475754826, %v410
      %v414 = vor.u32 %v412, %v413
      %v415 = vshll.u32 2475754826, %v409
      %v416 = vshrl.u32 2131351028, %v410
      %v417 = vor.u32 %v415, %v416
      %v418 = vshll.u32 2131351028, %v409
      %v419 = vshrl.u32 2102212464, %v410
      %v420 = vor.u32 %v418, %v419
      %v421 = vshll.u32 2102212464, %v409
      %v422 = vshrl.u32 920167782, %v410
      %v423 = vor.u32 %v421, %v422
      %v424 = vshll.u32 920167782, %v409
      %v425 = vshrl.u32 1326507024, %v410
      %v426 = vor.u32 %v424, %v425
      %vm427 = vcmp.lt.s32.totalorder %v408, 1
      %vm428 = vcmp.lt.s32.totalorder %v408, 2
      %vm429 = vcmp.lt.s32.totalorder %v408, 3
      %vm430 = vcmp.lt.s32.totalorder %v408, 4
      %v431 = vsel %vm427, %v411, %v414
      %v432 = vsel %vm430, %v420, 2102212464
      %v433 = vsel %vm429, %v417, %v432
      %v434 = vsel %vm428, %v431, %v433
      %v435 = vsel %vm427, %v414, %v417
      %v436 = vsel %vm430, %v423, 920167782
      %v437 = vsel %vm429, %v420, %v436
      %v438 = vsel %vm428, %v435, %v437
      %v439 = vsel %vm427, %v417, %v420
      %v440 = vsel %vm430, %v426, 1326507024
      %v441 = vsel %vm429, %v423, %v440
      %v442 = vsel %vm428, %v439, %v441
      %v443 = vshll.u32 %v403, 8
      %v444 = vmul.u32.u64.compose %v443, %v442
      %v445 = vextract.low.u32 %v444
      %v446 = vextract.high.u32 %v444
      %v447 = vmul.u32.u64.compose %v443, %v438
      %v448 = vextract.low.u32 %v447
      %v449 = vextract.high.u32 %v447
      %v450 = vmul.u32 %v443, %v434
      %v451 = vadd.s32 %v446, %v448
      %vm452 = vc.u32 %v446, %v448
      %v453 = vadd.s32 %v449, 1
      %v454 = vsel %vm452, %v453, %v449
      %v455 = vadd.s32 %v450, %v454
      %v456 = vadd.s32 %v455, 536870912
      %v457 = vshrl.u32 %v456, 30
      %v458 = vshll.u32 %v457, 30
      %v459 = vsub.s32 %v455, %v458
      %vm460 = vcmp.lt.s32.totalorder %v459, 0
      %v461 = vsub.s32 0, %v459
      %v462 = vsel %vm460, %v461, %v459
      %v463 = vclz %v462
      %v464 = vsub.s32 %v463, 2
      %vm465 = vcmp.gt.s32.totalorder 0, %v464
      %v466 = vsel %vm465, 0, %v464
      %v467 = vsub.s32 32, %v466
      %v468 = vshll.u32 %v459, %v466
      %v469 = vshrl.u32 %v451, %v467
      %v470 = vor.u32 %v468, %v469
      %v471 = vsub.s32 4294967266, %v466
      %v472 = vadd.s32 %v471, 127
      %v473 = vshll.u32 %v472, 23
      %v474 = vor.u32 4788187, %v473
      %v475 = vand.u32 2147483647, %v474
      %v477 = vcvt.s32.f32 %v470
      %v478 = vmul.f32 %v477, %v475
      %v479 = vxor.u32 %v478, 2147483648
      %v480 = vsel %vm397, %v479, %v478
      %v481 = vsub.s32 4, %v457
      %v482 = vsel %vm397, %v481, %v457
      %v483 = vsel %vm396, %v288, %v480
      %v484 = vsel %vm396, 0, %v482
      %v485 = vcosq.f32.pop %v483
      %v486 = vsinq.f32.pop %v483
      %vm487 = vweird.f32 %v288
      %v488 = vadd.s32 %v484, 3
      %v489 = vand.u32 %v488, 3
      %vm490 = vcmp.lt.s32.totalorder %v489, 2
      %vm491 = vcmp.eq.s32.totalorder %v489, 0
      %v492 = vxor.u32 %v486, 2147483648
      %v493 = vsel %vm491, %v485, %v492
      %vm494 = vcmp.eq.s32.totalorder %v489, 2
      %v495 = vxor.u32 %v485, 2147483648
      %v496 = vsel %vm494, %v495, %v486
      %v497 = vsel %vm490, %v493, %v496
      %v498 = vsel %vm487, nan, %v497
      %v499 = vand.u32 2147483647, %v289
      %vm500 = vcmp.le.f32.partialorder %v499, 0.7853982
      %vm501 = vcmp.lt.s32.totalorder %v289, 0
      %v502 = vand.u32 %v289, 2139095040
      %v503 = vshrl.u32 %v502, 23
      %v504 = vsub.s32 %v503, 127
      %v505 = vand.u32 2147483647, %v289
      %v506 = vand.u32 %v505, 8388607
      %v507 = vor.u32 %v506, 8388608
      %v508 = vsub.s32 0, %v507
      %v509 = vadd.s32 %v504, 1
      %vm510 = vcmp.gt.s32.totalorder %v509, 0
      %v511 = vsel %vm510, %v509, 0
      %v512 = vshrl.u32 %v511, 5
      %v513 = vand.u32 %v511, 31
      %v514 = vsub.s32 32, %v513
      %v515 = vshrl.u32 683565275, %v514
      %v516 = vshll.u32 683565275, %v513
      %v517 = vshrl.u32 2475754826, %v514
      %v518 = vor.u32 %v516, %v517
      %v519 = vshll.u32 2475754826, %v513
      %v520 = vshrl.u32 2131351028, %v514
      %v521 = vor.u32 %v519, %v520
      %v522 = vshll.u32 2131351028, %v513
      %v523 = vshrl.u32 2102212464, %v514
      %v524 = vor.u32 %v522, %v523
      %v525 = vshll.u32 2102212464, %v513
      %v526 = vshrl.u32 920167782, %v514
      %v527 = vor.u32 %v525, %v526
      %v528 = vshll.u32 920167782, %v513
      %v529 = vshrl.u32 1326507024, %v514
      %v530 = vor.u32 %v528, %v529
      %vm531 = vcmp.lt.s32.totalorder %v512, 1
      %vm532 = vcmp.lt.s32.totalorder %v512, 2
      %vm533 = vcmp.lt.s32.totalorder %v512, 3
      %vm534 = vcmp.lt.s32.totalorder %v512, 4
      %v535 = vsel %vm531, %v515, %v518
      %v536 = vsel %vm534, %v524, 2102212464
      %v537 = vsel %vm533, %v521, %v536
      %v538 = vsel %vm532, %v535, %v537
      %v539 = vsel %vm531, %v518, %v521
      %v540 = vsel %vm534, %v527, 920167782
      %v541 = vsel %vm533, %v524, %v540
      %v542 = vsel %vm532, %v539, %v541
      %v543 = vsel %vm531, %v521, %v524
      %v544 = vsel %vm534, %v530, 1326507024
      %v545 = vsel %vm533, %v527, %v544
      %v546 = vsel %vm532, %v543, %v545
      %v547 = vshll.u32 %v507, 8
      %v548 = vmul.u32.u64.compose %v547, %v546
      %v549 = vextract.low.u32 %v548
      %v550 = vextract.high.u32 %v548
      %v551 = vmul.u32.u64.compose %v547, %v542
      %v552 = vextract.low.u32 %v551
      %v553 = vextract.high.u32 %v551
      %v554 = vmul.u32 %v547, %v538
      %v555 = vadd.s32 %v550, %v552
      %vm556 = vc.u32 %v550, %v552
      %v557 = vadd.s32 %v553, 1
      %v558 = vsel %vm556, %v557, %v553
      %v559 = vadd.s32 %v554, %v558
      %v560 = vadd.s32 %v559, 536870912
      %v561 = vshrl.u32 %v560, 30
      %v562 = vshll.u32 %v561, 30
      %v563 = vsub.s32 %v559, %v562
      %vm564 = vcmp.lt.s32.totalorder %v563, 0
      %v565 = vsub.s32 0, %v563
      %v566 = vsel %vm564, %v565, %v563
      %v567 = vclz %v566
      %v568 = vsub.s32 %v567, 2
      %vm569 = vcmp.gt.s32.totalorder 0, %v568
      %v570 = vsel %vm569, 0, %v568
      %v571 = vsub.s32 32, %v570
      %v572 = vshll.u32 %v563, %v570
      %v573 = vshrl.u32 %v555, %v571
      %v574 = vor.u32 %v572, %v573
      %v575 = vsub.s32 4294967266, %v570
      %v576 = vadd.s32 %v575, 127
      %v577 = vshll.u32 %v576, 23
      %v578 = vor.u32 4788187, %v577
      %v579 = vand.u32 2147483647, %v578
      %v581 = vcvt.s32.f32 %v574
      %v582 = vmul.f32 %v581, %v579
      %v583 = vxor.u32 %v582, 2147483648
      %v584 = vsel %vm501, %v583, %v582
      %v585 = vsub.s32 4, %v561
      %v586 = vsel %vm501, %v585, %v561
      %v587 = vsel %vm500, %v289, %v584
      %v588 = vsel %vm500, 0, %v586
      %v589 = vcosq.f32.pop %v587
      %v590 = vsinq.f32.pop %v587
      %vm591 = vweird.f32 %v289
      %v592 = vadd.s32 %v588, 3
      %v593 = vand.u32 %v592, 3
      %vm594 = vcmp.lt.s32.totalorder %v593, 2
      %vm595 = vcmp.eq.s32.totalorder %v593, 0
      %v596 = vxor.u32 %v590, 2147483648
      %v597 = vsel %vm595, %v589, %v596
      %vm598 = vcmp.eq.s32.totalorder %v593, 2
      %v599 = vxor.u32 %v589, 2147483648
      %v600 = vsel %vm598, %v599, %v590
      %v601 = vsel %vm594, %v597, %v600
      %v602 = vsel %vm591, nan, %v601
      %v603 = vand.u32 2147483647, %v290
      %vm604 = vcmp.le.f32.partialorder %v603, 0.7853982
      %vm605 = vcmp.lt.s32.totalorder %v290, 0
      %v606 = vand.u32 %v290, 2139095040
      %v607 = vshrl.u32 %v606, 23
      %v608 = vsub.s32 %v607, 127
      %v609 = vand.u32 2147483647, %v290
      %v610 = vand.u32 %v609, 8388607
      %v611 = vor.u32 %v610, 8388608
      %v612 = vsub.s32 0, %v611
      %v613 = vadd.s32 %v608, 1
      %vm614 = vcmp.gt.s32.totalorder %v613, 0
      %v615 = vsel %vm614, %v613, 0
      %v616 = vshrl.u32 %v615, 5
      %v617 = vand.u32 %v615, 31
      %v618 = vsub.s32 32, %v617
      %v619 = vshrl.u32 683565275, %v618
      %v620 = vshll.u32 683565275, %v617
      %v621 = vshrl.u32 2475754826, %v618
      %v622 = vor.u32 %v620, %v621
      %v623 = vshll.u32 2475754826, %v617
      %v624 = vshrl.u32 2131351028, %v618
      %v625 = vor.u32 %v623, %v624
      %v626 = vshll.u32 2131351028, %v617
      %v627 = vshrl.u32 2102212464, %v618
      %v628 = vor.u32 %v626, %v627
      %v629 = vshll.u32 2102212464, %v617
      %v630 = vshrl.u32 920167782, %v618
      %v631 = vor.u32 %v629, %v630
      %v632 = vshll.u32 920167782, %v617
      %v633 = vshrl.u32 1326507024, %v618
      %v634 = vor.u32 %v632, %v633
      %vm635 = vcmp.lt.s32.totalorder %v616, 1
      %vm636 = vcmp.lt.s32.totalorder %v616, 2
      %vm637 = vcmp.lt.s32.totalorder %v616, 3
      %vm638 = vcmp.lt.s32.totalorder %v616, 4
      %v639 = vsel %vm635, %v619, %v622
      %v640 = vsel %vm638, %v628, 2102212464
      %v641 = vsel %vm637, %v625, %v640
      %v642 = vsel %vm636, %v639, %v641
      %v643 = vsel %vm635, %v622, %v625
      %v644 = vsel %vm638, %v631, 920167782
      %v645 = vsel %vm637, %v628, %v644
      %v646 = vsel %vm636, %v643, %v645
      %v647 = vsel %vm635, %v625, %v628
      %v648 = vsel %vm638, %v634, 1326507024
      %v649 = vsel %vm637, %v631, %v648
      %v650 = vsel %vm636, %v647, %v649
      %v651 = vshll.u32 %v611, 8
      %v652 = vmul.u32.u64.compose %v651, %v650
      %v653 = vextract.low.u32 %v652
      %v654 = vextract.high.u32 %v652
      %v655 = vmul.u32.u64.compose %v651, %v646
      %v656 = vextract.low.u32 %v655
      %v657 = vextract.high.u32 %v655
      %v658 = vmul.u32 %v651, %v642
      %v659 = vadd.s32 %v654, %v656
      %vm660 = vc.u32 %v654, %v656
      %v661 = vadd.s32 %v657, 1
      %v662 = vsel %vm660, %v661, %v657
      %v663 = vadd.s32 %v658, %v662
      %v664 = vadd.s32 %v663, 536870912
      %v665 = vshrl.u32 %v664, 30
      %v666 = vshll.u32 %v665, 30
      %v667 = vsub.s32 %v663, %v666
      %vm668 = vcmp.lt.s32.totalorder %v667, 0
      %v669 = vsub.s32 0, %v667
      %v670 = vsel %vm668, %v669, %v667
      %v671 = vclz %v670
      %v672 = vsub.s32 %v671, 2
      %vm673 = vcmp.gt.s32.totalorder 0, %v672
      %v674 = vsel %vm673, 0, %v672
      %v675 = vsub.s32 32, %v674
      %v676 = vshll.u32 %v667, %v674
      %v677 = vshrl.u32 %v659, %v675
      %v678 = vor.u32 %v676, %v677
      %v679 = vsub.s32 4294967266, %v674
      %v680 = vadd.s32 %v679, 127
      %v681 = vshll.u32 %v680, 23
      %v682 = vor.u32 4788187, %v681
      %v683 = vand.u32 2147483647, %v682
      %v685 = vcvt.s32.f32 %v678
      %v686 = vmul.f32 %v685, %v683
      %v687 = vxor.u32 %v686, 2147483648
      %v688 = vsel %vm605, %v687, %v686
      %v689 = vsub.s32 4, %v665
      %v690 = vsel %vm605, %v689, %v665
      %v691 = vsel %vm604, %v290, %v688
      %v692 = vsel %vm604, 0, %v690
      %v693 = vcosq.f32.pop %v691
      %v694 = vsinq.f32.pop %v691
      %vm695 = vweird.f32 %v290
      %v696 = vadd.s32 %v692, 3
      %v697 = vand.u32 %v696, 3
      %vm698 = vcmp.lt.s32.totalorder %v697, 2
      %vm699 = vcmp.eq.s32.totalorder %v697, 0
      %v700 = vxor.u32 %v694, 2147483648
      %v701 = vsel %vm699, %v693, %v700
      %vm702 = vcmp.eq.s32.totalorder %v697, 2
      %v703 = vxor.u32 %v693, 2147483648
      %v704 = vsel %vm702, %v703, %v694
      %v705 = vsel %vm698, %v701, %v704
      %v706 = vsel %vm695, nan, %v705
      %707 = vst [vmem:[%s238] sm:$0xff] %v394
      %708 = vst [vmem:[%s238 + $0x8] sm:$0xff] %v498
      %709 = vst [vmem:[%s238 + $0x10] sm:$0xff] %v602
      %710 = vst [vmem:[%s238 + $0x18] sm:$0xff] %v706
      %s711 = smul.u32 2, %s19
      %p712 = scmp.lt.s32.totalorder %s18, 1
      %s713 = scalar_select %p712, %s18, 1
      %p714 = scmp.lt.s32.totalorder %s711, 3
      %s715 = scalar_select %p714, %s711, 3
      %s716 = smul.addr %s715, 2
      %s717 = smul.addr %s713, 8
      %s718 = sadd.s32 %s716, %s717
      %s719 = smul.addr %s718, 8
      %s720 = scalar_lea.vmem %s3, %s719
      // Predicated region
      $region33: #{position_embedding_sine.3} parent=31 // pred_check
        %p721 = pneg %p124
      $region34: #{position_embedding_sine.3} parent=31 // pred_check_branch
        %723 = sbr.rel (%p721) target = $region36
      $region35: #{position_embedding_sine.3} parent=31 // pred_region
        %s724 = smul.u32 2, %s19
      $region36: #{position_embedding_sine.3} parent=31 // pred_fallthru
        _
    $region32: #{position_embedding_sine.3} parent=5 // pred_fallthru
      _
    %p725 = scmp.le.s32.totalorder 2, %s9
    // Predicated region
    $region37: #{position_embedding_sine.3} parent=5 // pred_check
      %p726 = pneg %p725
    $region38: #{position_embedding_sine.3} parent=5 // pred_check_branch
      %728 = sbr.rel (%p726) target = $region40
    $region39: #{position_embedding_sine.3} parent=5 // pred_region
      %s729 = ssub.s32 %s9, 2
      // Predicated region
      $region41: #{position_embedding_sine.3} parent=39 // pred_check
        %p730 = pneg %p130
      $region42: #{position_embedding_sine.3} parent=39 // pred_check_branch
        %732 = sbr.rel (%p730) target = $region44
      $region43: #{position_embedding_sine.3} parent=39 // pred_region
        %s733 = smul.u32 2, %s21
        %p734 = scmp.lt.s32.totalorder %s20, 1
        %s735 = scalar_select %p734, %s20, 1
        %p736 = scmp.lt.s32.totalorder %s733, 3
        %s737 = scalar_select %p736, %s733, 3
        %s738 = smul.addr %s737, 2
        %s739 = smul.addr %s735, 8
        %s740 = sadd.s32 %s738, %s739
        %s741 = smul.addr %s740, 8
        %s742 = scalar_lea.vmem %s3, %s741
      $region44: #{position_embedding_sine.3} parent=39 // pred_fallthru
        _
    $region40: #{position_embedding_sine.3} parent=5 // pred_fallthru
      _
  $region6: #{position_embedding_sine.3} parent=0 // loop_footer
    %s13 = sadd.s32 1, %s9
  $region7: #{position_embedding_sine.3} parent=0 // loop_footer_branch
    %8 = sbr.rel target = $region3
  $region8: #{position_embedding_sine.3} parent=0 // loop_exit
    _

</llo_original>
